<compile_context>
chip_gen: v6e
topology: v6e:2x2x1
jax: 0.10.0
libtpu: 0.0.40
codegen_flags: <defaults>
</compile_context>

<pallas_src>
import math
from functools import partial

import jax
import jax.numpy as jnp
from jax import lax
from jax.experimental import pallas as pl
from jax.experimental.pallas import tpu as pltpu

LANE = 128
SUBLANE = 8


def _sublane_multiple(dtype) -> int:
    # Sub-32-bit dtypes pack along sublanes: block's second-to-last dim must be a
    # multiple of 8 (32-bit), 16 (16-bit) or 32 (8-bit).
    return {4: 8, 2: 16, 1: 32}.get(jnp.dtype(dtype).itemsize, 8)


def _bbce_partial_kernel(pred_ref, gt_ref, ysum_ref, asum_ref, bsum_ref, *,
                         block_rows, blocks_per_split, num_blocks,
                         last_valid, needs_tail_mask, has_overhang):
    s = pl.program_id(0)            # split (parallel -> a TensorCore on v7x)
    i = pl.program_id(1)            # streaming block within the split
    g = s * blocks_per_split + i    # global block index

    @pl.when(i == 0)
    def _():
        ysum_ref[...] = jnp.zeros_like(ysum_ref)
        asum_ref[...] = jnp.zeros_like(asum_ref)
        bsum_ref[...] = jnp.zeros_like(bsum_ref)

    x = pred_ref[...].astype(jnp.float32)   # (block_rows, LANE)
    y = gt_ref[...].astype(jnp.float32)

    # Stable softplus(-x) = log1p(exp(-|x|)) + max(-x, 0)  (exp/log on EUP slot).
    sp = jnp.log1p(jnp.exp(-jnp.abs(x))) + jnp.maximum(-x, 0.0)
    t = x + sp
    c_a = t - y * t          # (1 - y) * (x + softplus(-x))
    c_b = y * sp             # y * softplus(-x)

    grp = block_rows // SUBLANE

    def accumulate(cy, ca, cb):
        # Fold each (block_rows, 128) tile onto the private (8, 128) accumulator
        # blocks with pure within-lane VPU adds; the cross-lane/sublane reduce
        # happens once, on the tiny partial sums, in the JAX wrapper.
        # TODO(synk): if a v7x bundle dump shows VALU critical, offload this fold
        #             to the idle MXU (ones(8, block_rows) @ c, f32 accumulate).
        ysum_ref[0] += cy.reshape(grp, SUBLANE, LANE).sum(axis=0)
        asum_ref[0] += ca.reshape(grp, SUBLANE, LANE).sum(axis=0)
        bsum_ref[0] += cb.reshape(grp, SUBLANE, LANE).sum(axis=0)

    if needs_tail_mask or has_overhang:
        full_limit = num_blocks - 1 if needs_tail_mask else num_blocks

        @pl.when(g < full_limit)
        def _():
            accumulate(y, c_a, c_b)

        if needs_tail_mask:
            @pl.when(g == num_blocks - 1)
            def _():
                # Block-local flat index -> no int32-overflow risk. jnp.where is
                # a select: NaN/Inf computed on pad/OOB garbage never propagates.
                r = lax.broadcasted_iota(jnp.int32, (block_rows, LANE), 0)
                c = lax.broadcasted_iota(jnp.int32, (block_rows, LANE), 1)
                m = (r * LANE + c) < last_valid
                zero = jnp.zeros_like(x)
                accumulate(jnp.where(m, y, zero),
                           jnp.where(m, c_a, zero),
                           jnp.where(m, c_b, zero))
        # Blocks with g >= num_blocks (grid overhang of an uneven split) add nothing.
    else:
        accumulate(y, c_a, c_b)


def bbce_with_logit_loss(pred, gt, *, block_rows=4096, num_splits=2):
    assert pred.shape == gt.shape, "pred and gt must have identical shapes"
    total_n = int(math.prod(pred.shape))
    assert total_n > 0

    if gt.dtype == jnp.bool_:
        gt = gt.astype(jnp.int8)          # keep the streamed HBM footprint small

    flat_p = pred.reshape(-1)
    flat_g = gt.reshape(-1)

    mult = max(_sublane_multiple(flat_p.dtype), _sublane_multiple(flat_g.dtype))
    rows = max(int(pl.cdiv(total_n, LANE)), mult)
    padded = rows * LANE
    if padded != total_n:
        # Rare path: numel not a multiple of 128 (or a tiny input). Pad elements
        # are masked out inside the kernel, so values do not matter.
        flat_p = jnp.pad(flat_p, (0, padded - total_n))
        flat_g = jnp.pad(flat_g, (0, padded - total_n))

    p2 = flat_p.reshape(rows, LANE)
    g2 = flat_g.reshape(rows, LANE)

    # Tile height: multiple of the packed sublane tile, clamped to the input.
    block_rows = max(mult, (int(block_rows) // mult) * mult)
    block_rows = min(block_rows, (rows // mult) * mult)
    block_elems = block_rows * LANE

    num_blocks = int(pl.cdiv(rows, block_rows))
    num_splits = max(1, min(int(num_splits), num_blocks))
    blocks_per_split = int(pl.cdiv(num_blocks, num_splits))
    has_overhang = num_splits * blocks_per_split != num_blocks

    # Valid element count inside the last real block (compile-time constant).
    last_valid = total_n - (num_blocks - 1) * block_elems
    needs_tail_mask = last_valid != block_elems

    if has_overhang:
        # Overhang blocks re-read the last real block (clamped index) and are
        # fully masked out inside the kernel.
        def in_map(s, i):
            return (jnp.minimum(s * blocks_per_split + i, num_blocks - 1), 0)
    else:
        def in_map(s, i):
            return (s * blocks_per_split + i, 0)

    def out_map(s, i):
        return (s, 0, 0)

    kernel = partial(_bbce_partial_kernel,
                     block_rows=block_rows,
                     blocks_per_split=blocks_per_split,
                     num_blocks=num_blocks,
                     last_valid=last_valid,
                     needs_tail_mask=needs_tail_mask,
                     has_overhang=has_overhang)

    part_shape = jax.ShapeDtypeStruct((num_splits, SUBLANE, LANE), jnp.float32)
    part_spec = pl.BlockSpec((1, SUBLANE, LANE), out_map)

    p_item = p2.dtype.itemsize
    g_item = g2.dtype.itemsize
    # Double-buffered input blocks + headroom for spilled f32 intermediates.
    in_bytes = 2 * block_elems * (p_item + g_item)
    spill_bytes = 8 * block_elems * 4
    vmem_limit = int(min(max(in_bytes + spill_bytes + (4 << 20), 32 << 20), 56 << 20))

    cost = pl.CostEstimate(
        flops=12 * total_n,
        transcendentals=2 * total_n,
        bytes_accessed=p2.size * p_item + g2.size * g_item
        + 3 * num_splits * SUBLANE * LANE * 4)

    ysum, asum, bsum = pl.pallas_call(
        kernel,
        out_shape=(part_shape, part_shape, part_shape),
        grid_spec=pltpu.PrefetchScalarGridSpec(
            num_scalar_prefetch=0,
            grid=(num_splits, blocks_per_split),
            in_specs=[
                pl.BlockSpec((block_rows, LANE), in_map),
                pl.BlockSpec((block_rows, LANE), in_map),
            ],
            out_specs=(part_spec, part_spec, part_spec),
        ),
        compiler_params=pltpu.CompilerParams(
            dimension_semantics=("parallel", "arbitrary"),
            vmem_limit_bytes=vmem_limit),
        cost_estimate=cost,
    )(p2, g2)

    # Tiny cross-split combine + finalize (exactly the PyTorch math).
    sum_y = jnp.sum(ysum)
    loss_a = jnp.sum(asum)
    loss_b = jnp.sum(bsum)
    eps = jnp.float32(1e-10)
    n = jnp.float32(total_n)          # f32 divisor, same as a float32 torch mean
    count_pos = sum_y + eps
    count_neg = n - sum_y
    ratio = count_neg / count_pos
    w_neg = count_pos / (count_pos + count_neg)
    return w_neg * ((loss_a + ratio * loss_b) / n)


def _reference(pred, gt):
    """Pure-JAX mirror of the PyTorch forward for correctness checking."""
    eps = 1e-10
    count_pos = jnp.sum(gt) + eps
    count_neg = jnp.sum(1.0 - gt)
    ratio = count_neg / count_pos
    w_neg = count_pos / (count_pos + count_neg)
    x, y = pred, gt
    sp = jnp.log1p(jnp.exp(-jnp.abs(x))) + jnp.maximum(-x, 0.0)
    log_weight = 1.0 + (ratio - 1.0) * y
    loss = (1.0 - y) * x + log_weight * sp
    return w_neg * jnp.mean(loss)


if __name__ == "__main__":
    key = jax.random.PRNGKey(0)
    kp, kg = jax.random.split(key)

    # NCHW, same convention as the PyTorch module (B=2, C=4, H=W=16)
    pred = jax.random.normal(kp, (2, 4, 16, 16), dtype=jnp.float32)
    gt = (jax.random.uniform(kg, (2, 4, 16, 16)) > 0.7).astype(jnp.float32)

    loss = bbce_with_logit_loss(pred, gt)
    jax.block_until_ready(loss)
    ref = _reference(pred, gt)
    assert jnp.allclose(loss, ref, atol=1e-5, rtol=1e-5), (float(loss), float(ref))

    # Ragged numel (not a multiple of 128) exercises the pad + tail-mask path and
    # the 2-way split grid.
    kp2, kg2 = jax.random.split(kg)
    pred_r = jax.random.normal(kp2, (2, 4, 15, 15), dtype=jnp.float32)
    gt_r = (jax.random.uniform(kg2, (2, 4, 15, 15)) > 0.5).astype(jnp.float32)
    loss_r = bbce_with_logit_loss(pred_r, gt_r)
    ref_r = _reference(pred_r, gt_r)
    assert jnp.allclose(loss_r, ref_r, atol=1e-5, rtol=1e-5), (float(loss_r), float(ref_r))

    # Narrow-dtype interface (bf16 logits, int8 mask): compare against the f32
    # reference evaluated on the same upcast values.
    loss_q = bbce_with_logit_loss(pred.astype(jnp.bfloat16), gt.astype(jnp.int8))
    ref_q = _reference(pred.astype(jnp.bfloat16).astype(jnp.float32), gt)
    assert jnp.allclose(loss_q, ref_q, atol=1e-5, rtol=1e-5), (float(loss_q), float(ref_q))

    print("KERNEL_OK")
</pallas_src>

<mosaic_0001>
module attributes {stable_mosaic.version = 11 : i64} {
  func.func @_bbce_partial_kernel(%arg0: i32, %arg1: i32, %arg2: memref<16x128xf32, #tpu.memory_space<vmem>>, %arg3: memref<16x128xf32, #tpu.memory_space<vmem>>, %arg4: memref<1x8x128xf32, #tpu.memory_space<vmem>>, %arg5: memref<1x8x128xf32, #tpu.memory_space<vmem>>, %arg6: memref<1x8x128xf32, #tpu.memory_space<vmem>>) attributes {dimension_semantics = [#tpu.dimension_semantics<parallel>, #tpu.dimension_semantics<arbitrary>], iteration_bounds = array<i64: 1, 1>, scalar_prefetch = 0 : i64, scratch_operands = 0 : i64, tpu.core_type = #tpu.core_type<tc>, window_params = [{transform_indices = @transform_0, window_bounds = array<i64: 16, 128>}, {transform_indices = @transform_1, window_bounds = array<i64: 16, 128>}, {transform_indices = @transform_2, window_bounds = array<i64: 1, 8, 128>}, {transform_indices = @transform_3, window_bounds = array<i64: 1, 8, 128>}, {transform_indices = @transform_4, window_bounds = array<i64: 1, 8, 128>}]} {
    %c0_i32 = arith.constant 0 : i32
    %0 = arith.cmpi eq, %arg1, %c0_i32 : i32
    %1 = arith.extui %0 : i1 to i32
    %c0_i32_0 = arith.constant 0 : i32
    %2 = arith.cmpi ne, %1, %c0_i32_0 : i32
    scf.if %2 {
      %cst_27 = arith.constant 0.000000e+00 : f32
      %43 = vector.broadcast %cst_27 : f32 to vector<1x8x128xf32>
      %c0_28 = arith.constant 0 : index
      %c0_29 = arith.constant 0 : index
      %c0_30 = arith.constant 0 : index
      %44 = vector.load %arg4[%c0_28, %c0_29, %c0_30] : memref<1x8x128xf32, #tpu.memory_space<vmem>>, vector<1x8x128xf32>
      tpu.vector_store %arg4[%c0_28, %c0_29, %c0_30], %43 {strides = array<i32>} : memref<1x8x128xf32, #tpu.memory_space<vmem>>, vector<1x8x128xf32>,
      %cst_31 = arith.constant 0.000000e+00 : f32
      %45 = vector.broadcast %cst_31 : f32 to vector<1x8x128xf32>
      %c0_32 = arith.constant 0 : index
      %c0_33 = arith.constant 0 : index
      %c0_34 = arith.constant 0 : index
      %46 = vector.load %arg5[%c0_32, %c0_33, %c0_34] : memref<1x8x128xf32, #tpu.memory_space<vmem>>, vector<1x8x128xf32>
      tpu.vector_store %arg5[%c0_32, %c0_33, %c0_34], %45 {strides = array<i32>} : memref<1x8x128xf32, #tpu.memory_space<vmem>>, vector<1x8x128xf32>,
      %cst_35 = arith.constant 0.000000e+00 : f32
      %47 = vector.broadcast %cst_35 : f32 to vector<1x8x128xf32>
      %c0_36 = arith.constant 0 : index
      %c0_37 = arith.constant 0 : index
      %c0_38 = arith.constant 0 : index
      %48 = vector.load %arg6[%c0_36, %c0_37, %c0_38] : memref<1x8x128xf32, #tpu.memory_space<vmem>>, vector<1x8x128xf32>
      tpu.vector_store %arg6[%c0_36, %c0_37, %c0_38], %47 {strides = array<i32>} : memref<1x8x128xf32, #tpu.memory_space<vmem>>, vector<1x8x128xf32>,
    } else {
    }
    %c0 = arith.constant 0 : index
    %c0_1 = arith.constant 0 : index
    %3 = vector.load %arg2[%c0, %c0_1] : memref<16x128xf32, #tpu.memory_space<vmem>>, vector<16x128xf32>
    %c0_2 = arith.constant 0 : index
    %c0_3 = arith.constant 0 : index
    %4 = vector.load %arg3[%c0_2, %c0_3] : memref<16x128xf32, #tpu.memory_space<vmem>>, vector<16x128xf32>
    %5 = math.absf %3 : vector<16x128xf32>
    %cst = arith.constant 0.000000e+00 : f32
    %6 = vector.broadcast %cst : f32 to vector<16x128xf32>
    %7 = arith.subf %6, %5 : vector<16x128xf32>
    %8 = math.exp %7 : vector<16x128xf32>
    %9 = math.log1p %8 : vector<16x128xf32>
    %cst_4 = arith.constant 0.000000e+00 : f32
    %10 = vector.broadcast %cst_4 : f32 to vector<16x128xf32>
    %11 = arith.subf %10, %3 : vector<16x128xf32>
    %cst_5 = arith.constant 0.000000e+00 : f32
    %12 = vector.broadcast %cst_5 : f32 to vector<16x128xf32>
    %13 = arith.maximumf %11, %12 : vector<16x128xf32>
    %14 = arith.addf %9, %13 : vector<16x128xf32>
    %15 = arith.addf %3, %14 : vector<16x128xf32>
    %16 = arith.mulf %4, %15 : vector<16x128xf32>
    %17 = arith.subf %15, %16 : vector<16x128xf32>
    %18 = arith.mulf %4, %14 : vector<16x128xf32>
    %c0_6 = arith.constant 0 : index
    %c0_7 = arith.constant 0 : index
    %c0_8 = arith.constant 0 : index
    %19 = vector.load %arg4[%c0_6, %c0_7, %c0_8] : memref<1x8x128xf32, #tpu.memory_space<vmem>>, vector<1x8x128xf32>
    %20 = vector.shape_cast %19 : vector<1x8x128xf32> to vector<8x128xf32>
    %21 = vector.shape_cast %4 : vector<16x128xf32> to vector<2x8x128xf32>
    %cst_9 = arith.constant dense<0.000000e+00> : vector<8x128xf32>
    %22 = vector.multi_reduction <add>, %21, %cst_9 [0] : vector<2x8x128xf32> to vector<8x128xf32>
    %23 = arith.addf %20, %22 : vector<8x128xf32>
    %c0_10 = arith.constant 0 : index
    %c0_11 = arith.constant 0 : index
    %c0_12 = arith.constant 0 : index
    %24 = vector.load %arg4[%c0_10, %c0_11, %c0_12] : memref<1x8x128xf32, #tpu.memory_space<vmem>>, vector<1x8x128xf32>
    %25 = vector.shape_cast %24 : vector<1x8x128xf32> to vector<8x128xf32>
    %26 = vector.shape_cast %23 : vector<8x128xf32> to vector<1x8x128xf32>
    tpu.vector_store %arg4[%c0_10, %c0_11, %c0_12], %26 {strides = array<i32>} : memref<1x8x128xf32, #tpu.memory_space<vmem>>, vector<1x8x128xf32>,
    %c0_13 = arith.constant 0 : index
    %c0_14 = arith.constant 0 : index
    %c0_15 = arith.constant 0 : index
    %27 = vector.load %arg5[%c0_13, %c0_14, %c0_15] : memref<1x8x128xf32, #tpu.memory_space<vmem>>, vector<1x8x128xf32>
    %28 = vector.shape_cast %27 : vector<1x8x128xf32> to vector<8x128xf32>
    %29 = vector.shape_cast %17 : vector<16x128xf32> to vector<2x8x128xf32>
    %cst_16 = arith.constant dense<0.000000e+00> : vector<8x128xf32>
    %30 = vector.multi_reduction <add>, %29, %cst_16 [0] : vector<2x8x128xf32> to vector<8x128xf32>
    %31 = arith.addf %28, %30 : vector<8x128xf32>
    %c0_17 = arith.constant 0 : index
    %c0_18 = arith.constant 0 : index
    %c0_19 = arith.constant 0 : index
    %32 = vector.load %arg5[%c0_17, %c0_18, %c0_19] : memref<1x8x128xf32, #tpu.memory_space<vmem>>, vector<1x8x128xf32>
    %33 = vector.shape_cast %32 : vector<1x8x128xf32> to vector<8x128xf32>
    %34 = vector.shape_cast %31 : vector<8x128xf32> to vector<1x8x128xf32>
    tpu.vector_store %arg5[%c0_17, %c0_18, %c0_19], %34 {strides = array<i32>} : memref<1x8x128xf32, #tpu.memory_space<vmem>>, vector<1x8x128xf32>,
    %c0_20 = arith.constant 0 : index
    %c0_21 = arith.constant 0 : index
    %c0_22 = arith.constant 0 : index
    %35 = vector.load %arg6[%c0_20, %c0_21, %c0_22] : memref<1x8x128xf32, #tpu.memory_space<vmem>>, vector<1x8x128xf32>
    %36 = vector.shape_cast %35 : vector<1x8x128xf32> to vector<8x128xf32>
    %37 = vector.shape_cast %18 : vector<16x128xf32> to vector<2x8x128xf32>
    %cst_23 = arith.constant dense<0.000000e+00> : vector<8x128xf32>
    %38 = vector.multi_reduction <add>, %37, %cst_23 [0] : vector<2x8x128xf32> to vector<8x128xf32>
    %39 = arith.addf %36, %38 : vector<8x128xf32>
    %c0_24 = arith.constant 0 : index
    %c0_25 = arith.constant 0 : index
    %c0_26 = arith.constant 0 : index
    %40 = vector.load %arg6[%c0_24, %c0_25, %c0_26] : memref<1x8x128xf32, #tpu.memory_space<vmem>>, vector<1x8x128xf32>
    %41 = vector.shape_cast %40 : vector<1x8x128xf32> to vector<8x128xf32>
    %42 = vector.shape_cast %39 : vector<8x128xf32> to vector<1x8x128xf32>
    tpu.vector_store %arg6[%c0_24, %c0_25, %c0_26], %42 {strides = array<i32>} : memref<1x8x128xf32, #tpu.memory_space<vmem>>, vector<1x8x128xf32>,
    return
  }
  func.func @transform_0(%arg0: i32, %arg1: i32) -> (i32, i32) {
    %c1_i32 = arith.constant 1 : i32
    %0 = arith.muli %arg0, %c1_i32 : i32
    %1 = arith.addi %0, %arg1 : i32
    %c0_i32 = arith.constant 0 : i32
    %c0_i32_0 = arith.constant 0 : i32
    return %1, %c0_i32 : i32, i32
  }
  func.func @transform_1(%arg0: i32, %arg1: i32) -> (i32, i32) {
    %c1_i32 = arith.constant 1 : i32
    %0 = arith.muli %arg0, %c1_i32 : i32
    %1 = arith.addi %0, %arg1 : i32
    %c0_i32 = arith.constant 0 : i32
    %c0_i32_0 = arith.constant 0 : i32
    return %1, %c0_i32 : i32, i32
  }
  func.func @transform_2(%arg0: i32, %arg1: i32) -> (i32, i32, i32) {
    %c0_i32 = arith.constant 0 : i32
    %c0_i32_0 = arith.constant 0 : i32
    %c0_i32_1 = arith.constant 0 : i32
    return %arg0, %c0_i32, %c0_i32_0 : i32, i32, i32
  }
  func.func @transform_3(%arg0: i32, %arg1: i32) -> (i32, i32, i32) {
    %c0_i32 = arith.constant 0 : i32
    %c0_i32_0 = arith.constant 0 : i32
    %c0_i32_1 = arith.constant 0 : i32
    return %arg0, %c0_i32, %c0_i32_0 : i32, i32, i32
  }
  func.func @transform_4(%arg0: i32, %arg1: i32) -> (i32, i32, i32) {
    %c0_i32 = arith.constant 0 : i32
    %c0_i32_0 = arith.constant 0 : i32
    %c0_i32_1 = arith.constant 0 : i32
    return %arg0, %c0_i32, %c0_i32_0 : i32, i32, i32
  }
}

</mosaic_0001>

<llo_original>
// kernel: tpu_custom_call.1
$region0: #{tpu_custom_call.1}
  #allocation0 [shape = 'u32[]', space=smem, size = 0x4, offset = 0x4, fixed_abs, tag = 'smem constant byte address 0x4 - core index']
  #allocation1 [shape = 'u32[144,128]{1,0:T(1,128)}', space=vmem, size = 0x12000, scoped, tag = 'internal scratch']
  %s0 = inlined_call_operand.hbm [shape: f32[16,128], index: 0, kind: input, shape index: {}]
  %s1 = inlined_call_operand.hbm [shape: f32[16,128], index: 1, kind: input, shape index: {}]
  %s2 = inlined_call_operand.hbm [shape: f32[1,8,128], index: 2, kind: output, shape index: {0}]
  %s3 = inlined_call_operand.hbm [shape: f32[1,8,128], index: 3, kind: output, shape index: {1}]
  %s4 = inlined_call_operand.hbm [shape: f32[1,8,128], index: 4, kind: output, shape index: {2}]
  %5 = xla_tuple %s2, %s3, %s4
  %s6 = sld [smem:[#allocation0]]
  $region46: #{tpu_custom_call.1} parent=0
    _
  %s8 = ssub.s32 1, %s6
  %s9 = scalar_select 0, %s8, %s6
  $region1: #{tpu_custom_call.1} parent=0
    #allocation2 [shape = 'u8[8192]{0}', space=vmem, size = 0x2000, scoped, tag = 'input window, operand 0, single buffered']
    #allocation3 [shape = 's32[1]{0}', space=sflag, size = 0x4, scoped, tag = 'scoped memory for tpu_custom_call.1']
    #allocation4 [shape = 's32[1]{0}', space=sflag, size = 0x4, scoped, tag = 'scoped memory for tpu_custom_call.1']
    #allocation5 [shape = 'u8[8192]{0}', space=vmem, size = 0x2000, scoped, tag = 'input window, operand 1, single buffered']
    #allocation6 [shape = 's32[1]{0}', space=sflag, size = 0x4, scoped, tag = 'scoped memory for tpu_custom_call.1']
    #allocation7 [shape = 'u8[4096]{0}', space=vmem, size = 0x1000, scoped, tag = 'output window, operand 0, single buffered']
    #allocation8 [shape = 'u8[4096]{0}', space=vmem, size = 0x1000, scoped, tag = 'output window, operand 1, single buffered']
    #allocation9 [shape = 's32[1]{0}', space=sflag, size = 0x4, scoped, tag = 'scoped memory for tpu_custom_call.1']
    #allocation10 [shape = 'u8[4096]{0}', space=vmem, size = 0x1000, scoped, tag = 'output window, operand 2, single buffered']
    %10 = vsyncpa [#allocation3], 0
    %11 = vsyncpa [#allocation6], 0
    %12 = vsyncpa [#allocation4], 0
    %13 = vsyncpa [#allocation9], 0
    // Predicated region
    $region2: #{tpu_custom_call.1} parent=1 // pred_check
      _
    $region3: #{tpu_custom_call.1} parent=1 // pred_check_branch
      %15 = sbr.rel (0) target = $region5
    $region4: #{tpu_custom_call.1} parent=1 // pred_region
      %s16 = sadd.s32 0, 0
      %s17 = smul.u32 2, %s16
      %s19 = ssub.s32 256, 256
      %20 = vsyncadd [#allocation3], %s19
      %s21 = smul.addr %s17, 128
      %s22 = scalar_lea.hbm %s0, %s21
      %s23 = sshll.u32 [#allocation2], 4
      %s24 = int_to_ptr.vmem [resolvable:$true] %s23
      %29 = dma.hbm_to_vmem [thread:$0]  %s22, 256, %s24, [#allocation3], 128, 128, 8
    $region5: #{tpu_custom_call.1} parent=1 // pred_fallthru
      _
    // Predicated region
    $region6: #{tpu_custom_call.1} parent=1 // pred_check
      _
    $region7: #{tpu_custom_call.1} parent=1 // pred_check_branch
      %31 = sbr.rel (0) target = $region9
    $region8: #{tpu_custom_call.1} parent=1 // pred_region
      %s32 = sadd.s32 0, 0
      %s33 = smul.u32 2, %s32
      %s35 = ssub.s32 256, 256
      %36 = vsyncadd [#allocation6], %s35
      %s37 = smul.addr %s33, 128
      %s38 = scalar_lea.hbm %s1, %s37
      %s39 = sshll.u32 [#allocation5], 4
      %s40 = int_to_ptr.vmem [resolvable:$true] %s39
      %45 = dma.hbm_to_vmem [thread:$0]  %s38, 256, %s40, [#allocation6], 128, 128, 8
    $region9: #{tpu_custom_call.1} parent=1 // pred_fallthru
      _
    // Predicated region
    $region10: #{tpu_custom_call.1} parent=1 // pred_check
      _
    $region11: #{tpu_custom_call.1} parent=1 // pred_check_branch
      %47 = sbr.rel (0) target = $region13
    $region12: #{tpu_custom_call.1} parent=1 // pred_region
      %48 = dma.done [#allocation3], 256
    $region13: #{tpu_custom_call.1} parent=1 // pred_fallthru
      _
    // Predicated region
    $region14: #{tpu_custom_call.1} parent=1 // pred_check
      _
    $region15: #{tpu_custom_call.1} parent=1 // pred_check_branch
      %50 = sbr.rel (0) target = $region17
    $region16: #{tpu_custom_call.1} parent=1 // pred_region
      %51 = dma.done [#allocation6], 256
    $region17: #{tpu_custom_call.1} parent=1 // pred_fallthru
      _
    %s52 = sadd.s32 0, 0
    %s53 = smul.u32 2, %s52
    %s54 = sadd.s32 0, 0
    %s55 = smul.u32 2, %s54
    %p56 = scmp.eq.s32.totalorder 0, 0
    // Predicated region
    $region18: #{tpu_custom_call.1} parent=1 // pred_check
      %p57 = pneg %p56
    $region19: #{tpu_custom_call.1} parent=1 // pred_check_branch
      %59 = sbr.rel (%p57) target = $region21
    $region20: #{tpu_custom_call.1} parent=1 // pred_region
      %60 = vst [vmem:[#allocation7] sm:$0xff] 0.0
      %61 = vst [vmem:[#allocation8] sm:$0xff] 0.0
      %62 = vst [vmem:[#allocation10] sm:$0xff] 0.0
    $region21: #{tpu_custom_call.1} parent=1 // pred_fallthru
      _
    %v63 = vld [vmem:[#allocation2] sm:$0xff]
    %v64 = vld [vmem:[#allocation2 + $0x8] sm:$0xff]
    %v65 = vld [vmem:[#allocation5] sm:$0xff]
    %v66 = vld [vmem:[#allocation5 + $0x8] sm:$0xff]
    %v67 = vand.u32 2147483647, %v63
    %v68 = vand.u32 2147483647, %v64
    %v69 = vsub.f32 0.0, %v67
    %v70 = vsub.f32 0.0, %v68
    %v71 = vmul.f32 %v69, 1.442695
    %v72 = vpow.pop %v71
    %v73 = vmul.f32 %v70, 1.442695
    %v74 = vpow.pop %v73
    %v75 = vadd.f32 %v72, 1.0
    %v76 = vlog2.pop %v75
    %v77 = vmul.f32 %v76, 0.6931472
    %v78 = vmul.f32 -0.5, %v72
    %v79 = vadd.f32 %v78, 1.0
    %v80 = vmul.f32 %v79, %v72
    %v81 = vand.u32 2147483647, %v72
    %vm82 = vcmp.lt.f32.partialorder %v81, 0.0004427343
    %v83 = vsel %vm82, %v80, %v77
    %v84 = vadd.f32 %v74, 1.0
    %v85 = vlog2.pop %v84
    %v86 = vmul.f32 %v85, 0.6931472
    %v87 = vmul.f32 -0.5, %v74
    %v88 = vadd.f32 %v87, 1.0
    %v89 = vmul.f32 %v88, %v74
    %v90 = vand.u32 2147483647, %v74
    %vm91 = vcmp.lt.f32.partialorder %v90, 0.0004427343
    %v92 = vsel %vm91, %v89, %v86
    %v93 = vsub.f32 0.0, %v63
    %v94 = vsub.f32 0.0, %v64
    %v95 = vmax.f32 %v93, 0.0
    %v96 = vmax.f32 %v94, 0.0
    %v97 = vadd.f32 %v83, %v95
    %v98 = vadd.f32 %v92, %v96
    %v99 = vadd.f32 %v63, %v97
    %v100 = vadd.f32 %v64, %v98
    %v101 = vmul.f32 %v65, %v99
    %v102 = vmul.f32 %v66, %v100
    %v103 = vsub.f32 %v99, %v101
    %v104 = vsub.f32 %v100, %v102
    %v105 = vmul.f32 %v65, %v97
    %v106 = vmul.f32 %v66, %v98
    %v107 = vld [vmem:[#allocation7] sm:$0xff]
    %v108 = vadd.f32 %v65, %v66
    %v109 = vadd.f32 %v107, %v108
    %110 = vst [vmem:[#allocation7] sm:$0xff] %v109
    %v111 = vld [vmem:[#allocation8] sm:$0xff]
    %v112 = vadd.f32 %v103, %v104
    %v113 = vadd.f32 %v111, %v112
    %114 = vst [vmem:[#allocation8] sm:$0xff] %v113
    %v115 = vld [vmem:[#allocation10] sm:$0xff]
    %v116 = vadd.f32 %v105, %v106
    %v117 = vadd.f32 %v115, %v116
    %118 = vst [vmem:[#allocation10] sm:$0xff] %v117
    // Predicated region
    $region22: #{tpu_custom_call.1} parent=1 // pred_check
      _
    $region23: #{tpu_custom_call.1} parent=1 // pred_check_branch
      %120 = sbr.rel (0) target = $region25
    $region24: #{tpu_custom_call.1} parent=1 // pred_region
      %s122 = ssub.s32 128, 128
      %123 = vsyncadd [#allocation4], %s122
      %s125 = sshll.u32 [#allocation7], 4
      %s126 = int_to_ptr.vmem [resolvable:$true] %s125
      %128 = dma.vmem_to_hbm [thread:$0]  %s126, 128, %s2, [#allocation4]
    $region25: #{tpu_custom_call.1} parent=1 // pred_fallthru
      _
    // Predicated region
    $region26: #{tpu_custom_call.1} parent=1 // pred_check
      _
    $region27: #{tpu_custom_call.1} parent=1 // pred_check_branch
      %130 = sbr.rel (0) target = $region29
    $region28: #{tpu_custom_call.1} parent=1 // pred_region
      %s132 = ssub.s32 128, 128
      %133 = vsyncadd [#allocation9], %s132
      %s135 = sshll.u32 [#allocation8], 4
      %s136 = int_to_ptr.vmem [resolvable:$true] %s135
      %138 = dma.vmem_to_hbm [thread:$0]  %s136, 128, %s3, [#allocation9]
    $region29: #{tpu_custom_call.1} parent=1 // pred_fallthru
      _
    // Predicated region
    $region30: #{tpu_custom_call.1} parent=1 // pred_check
      _
    $region31: #{tpu_custom_call.1} parent=1 // pred_check_branch
      %140 = sbr.rel (0) target = $region33
    $region32: #{tpu_custom_call.1} parent=1 // pred_region
      %s142 = ssub.s32 128, 128
      %143 = vsyncadd [#allocation9], %s142
      %s145 = sshll.u32 [#allocation10], 4
      %s146 = int_to_ptr.vmem [resolvable:$true] %s145
      %148 = dma.vmem_to_hbm [thread:$0]  %s146, 128, %s4, [#allocation9]
    $region33: #{tpu_custom_call.1} parent=1 // pred_fallthru
      _
    // Predicated region
    $region34: #{tpu_custom_call.1} parent=1 // pred_check
      _
    $region35: #{tpu_custom_call.1} parent=1 // pred_check_branch
      %150 = sbr.rel (0) target = $region37
    $region36: #{tpu_custom_call.1} parent=1 // pred_region
      %151 = dma.done [#allocation4], 128
    $region37: #{tpu_custom_call.1} parent=1 // pred_fallthru
      _
    // Predicated region
    $region38: #{tpu_custom_call.1} parent=1 // pred_check
      _
    $region39: #{tpu_custom_call.1} parent=1 // pred_check_branch
      %153 = sbr.rel (0) target = $region41
    $region40: #{tpu_custom_call.1} parent=1 // pred_region
      %154 = dma.done [#allocation9], 128
    $region41: #{tpu_custom_call.1} parent=1 // pred_fallthru
      _
    // Predicated region
    $region42: #{tpu_custom_call.1} parent=1 // pred_check
      _
    $region43: #{tpu_custom_call.1} parent=1 // pred_check_branch
      %156 = sbr.rel (0) target = $region45
    $region44: #{tpu_custom_call.1} parent=1 // pred_region
      %157 = dma.done [#allocation9], 128
    $region45: #{tpu_custom_call.1} parent=1 // pred_fallthru
      _
    %158 = vsyncpa [#allocation3], 1
    %159 = vsyncpa [#allocation6], 1
    %160 = vsyncpa [#allocation4], 1
    %161 = vsyncpa [#allocation9], 1

</llo_original>
